<compile_context>
chip_gen: v5e
topology: v5e:2x2
jax: 0.10.0
libtpu: 0.0.40
codegen_flags: <defaults>
</compile_context>

<pallas_src>
import functools

import jax
import jax.numpy as jnp
from jax.experimental import pallas as pl
from jax.experimental.pallas import tpu as pltpu


# ----------------------------------------------------------------------------
# Hardware-aware sizing
# ----------------------------------------------------------------------------
def _vmem_capacity_bytes():
    try:
        info = pltpu.get_tpu_info()
        cap = getattr(info, "vmem_capacity_bytes", None)
        if cap:
            return int(cap)
    except Exception:
        pass
    return 64 * 1024 * 1024  # conservative default (v7x per-TensorCore VMEM)


_MIN_GRID_STEPS = 8                  # keep >= ~8 steps for pipelining/megacore
_BLOCK_BUDGET_CAP = 4 * 1024 * 1024  # per-block input bytes (x2 when pipelined)


def _pick_tn(n, bytes_per_slice):
    budget = min(_vmem_capacity_bytes() // 16, _BLOCK_BUDGET_CAP)
    tn = max(1, budget // max(1, bytes_per_slice))
    tn = min(tn, n, max(1, pl.cdiv(n, _MIN_GRID_STEPS)))
    return int(tn)


# ----------------------------------------------------------------------------
# Per-slice gradient-L1 terms (shared by both kernel variants)
# ----------------------------------------------------------------------------
def _slice_terms(p, g, m_f, col_ok, use_roll):
    """p, g: (H, W) f32; m_f: (H, W) f32 0/1 or None; col_ok: (H-1, W) bool
    (roll path only).  Returns (contrib, weight); weight is None if no mask.
    Semantics match grad()/grad_mask() of the PyTorch reference."""
    if use_roll:
        # Horizontal neighbour via an XLU lane roll (keeps vregs lane dense);
        # vertical neighbour via full-width sublane slices.  Column 0 (lane
        # wrap) is discarded through the col_ok select, so wrap garbage
        # (including NaN) never reaches the sums.
        def mag(x):
            dx = x - pltpu.roll(x, 1, 1)              # (H, W)
            dy = x[1:, :] - x[:-1, :]                 # (H-1, W)
            return jnp.abs(dx[1:, :]) + jnp.abs(dy)   # rows 1..H-1

        diff = jnp.abs(mag(p) - mag(g))               # (H-1, W)
        if m_f is None:
            return jnp.where(col_ok, diff, 0.0), None
        m_left = pltpu.roll(m_f, 1, 1)
        mg = m_f[1:, :] * m_left[1:, :] * m_f[:-1, :]  # (H-1, W)
        weight = jnp.where(col_ok, mg, 0.0)
        contrib = jnp.where(col_ok, diff * mg, 0.0)
        return contrib, weight

    # Fallback (lane-unaligned W): reference-style slicing.
    def mag(x):
        return (jnp.abs(x[1:, 1:] - x[1:, :-1]) +
                jnp.abs(x[1:, 1:] - x[:-1, 1:]))       # (H-1, W-1)

    diff = jnp.abs(mag(p) - mag(g))
    if m_f is None:
        return diff, None
    mg = m_f[1:, 1:] * m_f[1:, :-1] * m_f[:-1, 1:]
    return diff * mg, mg


# ----------------------------------------------------------------------------
# Pallas kernels
# ----------------------------------------------------------------------------
def _masked_grad_l1_kernel(pred_ref, gt_ref, mask_ref, sum_ref, cnt_ref, *,
                           n_total, tn, invert, use_roll):
    h, w = pred_ref.shape[1], pred_ref.shape[2]
    base = pl.program_id(0) * tn
    col_ok = None
    if use_roll:
        col_ok = jax.lax.broadcasted_iota(jnp.int32, (h - 1, w), 1) >= 1

    def body(t, carry):
        s_acc, c_acc = carry
        p = pred_ref[t].astype(jnp.float32)
        g = gt_ref[t].astype(jnp.float32)
        m_f = mask_ref[t].astype(jnp.float32)
        if invert:
            # torch: target[mask] = 1.0 / target[mask]; the select discards
            # the reciprocal at unmasked positions (matches reference).
            g = jnp.where(m_f > 0.0, pl.reciprocal(g, approx=False), g)
        contrib, weight = _slice_terms(p, g, m_f, col_ok, use_roll)
        s = jnp.sum(contrib, keepdims=True)   # (1, 1)
        c = jnp.sum(weight, keepdims=True)    # (1, 1)
        # Ragged-N tail: slices past n_total only exist in the (undefined)
        # tail of the last block; drop them with a select (kills garbage/NaN).
        valid = (base + t) < n_total
        s = jnp.where(valid, s, 0.0)
        c = jnp.where(valid, c, 0.0)
        return s_acc + s, c_acc + c

    zero = jnp.zeros((1, 1), jnp.float32)
    s_acc, c_acc = jax.lax.fori_loop(0, tn, body, (zero, zero))
    # One unmasked, lane-dense vreg store per output block; the cross-step
    # reduction happens in JAX (keeps the grid axis "parallel"-safe).
    sum_ref[...] = jnp.broadcast_to(s_acc, sum_ref.shape)
    cnt_ref[...] = jnp.broadcast_to(c_acc, cnt_ref.shape)


def _nomask_grad_l1_kernel(pred_ref, gt_ref, sum_ref, *, n_total, tn, use_roll):
    h, w = pred_ref.shape[1], pred_ref.shape[2]
    base = pl.program_id(0) * tn
    col_ok = None
    if use_roll:
        col_ok = jax.lax.broadcasted_iota(jnp.int32, (h - 1, w), 1) >= 1

    def body(t, s_acc):
        p = pred_ref[t].astype(jnp.float32)
        g = gt_ref[t].astype(jnp.float32)
        contrib, _ = _slice_terms(p, g, None, col_ok, use_roll)
        s = jnp.sum(contrib, keepdims=True)
        valid = (base + t) < n_total
        return s_acc + jnp.where(valid, s, 0.0)

    s_acc = jax.lax.fori_loop(0, tn, body, jnp.zeros((1, 1), jnp.float32))
    sum_ref[...] = jnp.broadcast_to(s_acc, sum_ref.shape)


# ----------------------------------------------------------------------------
# pallas_call wrapper: partial sums over all (H, W) slices
# ----------------------------------------------------------------------------
def _grad_l1_partial_sums(pred, gt, mask_i8, *, invert):
    """pred/gt: (N, H, W) in native dtype; mask_i8: (N, H, W) int8 or None.
    Returns (sum, count); count is None for the mask-free variant."""
    n, h, w = pred.shape
    masked = mask_i8 is not None
    assert masked or not invert
    use_roll = (w % 128 == 0)   # lane-aligned fast path

    bytes_per_slice = h * w * (pred.dtype.itemsize + gt.dtype.itemsize
                               + (1 if masked else 0))
    tn = _pick_tn(n, bytes_per_slice)
    grid = pl.cdiv(n, tn)

    in_spec = pl.BlockSpec((tn, h, w), lambda i: (i, 0, 0))
    out_spec = pl.BlockSpec((1, 8, 128), lambda i: (i, 0, 0))
    out_block = jax.ShapeDtypeStruct((grid, 8, 128), jnp.float32)

    # ~18 VPU ops/pixel (sub/abs/mul/select) + reciprocal when inverting.
    cost = pl.CostEstimate(
        flops=18 * n * h * w,
        transcendentals=(n * h * w) if invert else 0,
        bytes_accessed=(n * bytes_per_slice
                        + (2 if masked else 1) * grid * 8 * 128 * 4))

    params = pltpu.CompilerParams(
        dimension_semantics=("parallel",),
        vmem_limit_bytes=int(min(_vmem_capacity_bytes() // 2, 64 * 1024 * 1024)))

    if masked:
        kernel = functools.partial(_masked_grad_l1_kernel, n_total=n, tn=tn,
                                   invert=invert, use_roll=use_roll)
        outs = pl.pallas_call(
            kernel,
            out_shape=(out_block, out_block),
            grid_spec=pltpu.PrefetchScalarGridSpec(
                num_scalar_prefetch=0,
                grid=(grid,),
                in_specs=[in_spec, in_spec, in_spec],
                out_specs=[out_spec, out_spec]),
            compiler_params=params,
            cost_estimate=cost,
        )(pred, gt, mask_i8)
        return jnp.sum(outs[0][:, 0, 0]), jnp.sum(outs[1][:, 0, 0])

    kernel = functools.partial(_nomask_grad_l1_kernel, n_total=n, tn=tn,
                               use_roll=use_roll)
    out = pl.pallas_call(
        kernel,
        out_shape=out_block,
        grid_spec=pltpu.PrefetchScalarGridSpec(
            num_scalar_prefetch=0,
            grid=(grid,),
            in_specs=[in_spec, in_spec],
            out_specs=out_spec),
        compiler_params=params,
        cost_estimate=cost,
    )(pred, gt)
    return jnp.sum(out[:, 0, 0]), None


# ----------------------------------------------------------------------------
# Glue: multi-scale loop, pooling, final normalization (plain JAX)
# ----------------------------------------------------------------------------
def _avg_pool2(x):
    n, h, w = x.shape
    h2, w2 = (h // 2) * 2, (w // 2) * 2
    x = x[:, :h2, :w2]
    return x.reshape(n, h2 // 2, 2, w2 // 2, 2).mean(axis=(2, 4))


def _max_pool2(x):
    n, h, w = x.shape
    h2, w2 = (h // 2) * 2, (w // 2) * 2
    x = x[:, :h2, :w2]
    return x.reshape(n, h2 // 2, 2, w2 // 2, 2).max(axis=(2, 4))


def multi_scale_inverse_grad_l1_loss(inp, target, mask=None, num_scales=1,
                                     interpolate=True):
    """JAX/Pallas equivalent of MultiScaleInverseGradL1Loss.forward.

    inp, target: (B, C, H, W); mask: (B, C, H, W) bool or None.
    """
    if inp.shape[-2:] != target.shape[-2:]:
        # TODO(synk): bilinear (align_corners=True) interpolate branch is not
        #             implemented.
        raise NotImplementedError("input/target spatial shapes must match")

    b, c, h, w = inp.shape
    n = b * c
    p = inp.reshape(n, h, w)
    g = target.reshape(n, h, w)

    m_i8 = None
    invert_in_kernel = False
    if mask is not None:
        m_bool = mask.reshape(n, h, w)
        m_i8 = m_bool.astype(jnp.int8)
        if num_scales > 1:
            # Invert once up front (the pooled scales consume the inverted gt,
            # matching the PyTorch semantics of inverting before the loop).
            g = g.astype(jnp.float32)
            g = jnp.where(m_bool, 1.0 / g, g)
        else:
            invert_in_kernel = True   # single scale: fuse inversion in kernel

    loss = jnp.float32(0.0)
    for k in range(num_scales):
        s, cnt = _grad_l1_partial_sums(
            p, g, m_i8, invert=(invert_in_kernel and k == 0))
        if m_i8 is None:
            n_k, h_k, w_k = p.shape
            denom = n_k * (h_k - 1) * (w_k - 1)   # analytic count, no mask DMA
            loss = loss + s / denom
        else:
            # PyTorch only adds the term when valid > 0.
            loss = loss + jnp.where(cnt > 0, s / cnt, 0.0)
        if k < num_scales - 1:
            p = _avg_pool2(p)
            g = _avg_pool2(g)
            if m_i8 is not None:
                m_i8 = (_max_pool2(m_i8.astype(jnp.float32)) > 0).astype(jnp.int8)

    loss = loss / num_scales
    return loss * 100.0


# ----------------------------------------------------------------------------
# Pure-JAX reference (mirrors the PyTorch forward) for validation
# ----------------------------------------------------------------------------
def _ref_loss(inp, target, mask=None, num_scales=1):
    inp = inp.astype(jnp.float32)
    target = target.astype(jnp.float32)
    if mask is not None:
        target = jnp.where(mask, 1.0 / target, target)
    m = mask
    pred, gt = inp, target

    def mag(x):
        dx = x[..., 1:, 1:] - x[..., 1:, :-1]
        dy = x[..., 1:, 1:] - x[..., :-1, 1:]
        return jnp.abs(dx) + jnp.abs(dy)

    loss = jnp.float32(0.0)
    for k in range(num_scales):
        diff = jnp.abs(mag(pred) - mag(gt))
        if m is not None:
            mg = m[..., 1:, 1:] & m[..., 1:, :-1] & m[..., :-1, 1:]
            cnt = mg.sum()
            loss = loss + jnp.where(
                cnt > 0, (diff * mg.astype(jnp.float32)).sum() / cnt, 0.0)
        else:
            loss = loss + diff.mean()
        if k < num_scales - 1:
            bb, ch, hh, ww = pred.shape
            pred = pred.reshape(bb, ch, hh // 2, 2, ww // 2, 2).mean(axis=(3, 5))
            gt = gt.reshape(bb, ch, hh // 2, 2, ww // 2, 2).mean(axis=(3, 5))
            if m is not None:
                m = m.reshape(bb, ch, hh // 2, 2, ww // 2, 2).max(axis=(3, 5))
    return loss / num_scales * 100.0


if __name__ == "__main__":
    def make_inputs(key, shape):
        k1, k2, k3 = jax.random.split(key, 3)
        pred = jax.random.uniform(k1, shape, jnp.float32, 0.1, 5.0)
        target = jax.random.uniform(k2, shape, jnp.float32, 0.5, 2.0)
        mask = jax.random.bernoulli(k3, 0.8, shape)
        return pred, target, mask

    def check(pred, target, mask, num_scales):
        out = jax.block_until_ready(multi_scale_inverse_grad_l1_loss(
            pred, target, mask, num_scales=num_scales))
        ref = jax.block_until_ready(_ref_loss(
            pred, target, mask, num_scales=num_scales))
        assert jnp.allclose(out, ref, rtol=1e-5, atol=1e-5), (num_scales, out, ref)

    keys = jax.random.split(jax.random.PRNGKey(0), 3)

    # Module-default sized inputs (B=2, C=4, 16x16): masked (1 and 2 scales)
    # and mask=None.  W=16 -> slicing fallback path.
    pred, target, mask = make_inputs(keys[0], (2, 4, 16, 16))
    check(pred, target, mask, 1)
    check(pred, target, mask, 2)
    check(pred, target, None, 1)

    # Lane-aligned spatial shape -> exercises the pltpu.roll fast path at
    # scale 0 (and the slicing fallback at the pooled 64-wide scale 1).
    pred, target, mask = make_inputs(keys[1], (2, 2, 16, 128))
    check(pred, target, mask, 1)
    check(pred, target, mask, 2)
    check(pred, target, None, 1)

    # N = 9 slices -> TN = 2: ragged trailing grid block (in-kernel tail mask).
    pred, target, mask = make_inputs(keys[2], (3, 3, 8, 16))
    check(pred, target, mask, 1)

    print("KERNEL_OK")
</pallas_src>

<mosaic_0001>
module attributes {stable_mosaic.version = 11 : i64} {
  func.func @_masked_grad_l1_kernel(%arg0: i32, %arg1: memref<1x16x16xf32, #tpu.memory_space<vmem>>, %arg2: memref<1x16x16xf32, #tpu.memory_space<vmem>>, %arg3: memref<1x16x16xi8, #tpu.memory_space<vmem>>, %arg4: memref<1x8x128xf32, #tpu.memory_space<vmem>>, %arg5: memref<1x8x128xf32, #tpu.memory_space<vmem>>) attributes {dimension_semantics = [#tpu.dimension_semantics<parallel>], iteration_bounds = array<i64: 8>, scalar_prefetch = 0 : i64, scratch_operands = 0 : i64, tpu.core_type = #tpu.core_type<tc>, window_params = [{transform_indices = @transform_0, window_bounds = array<i64: 1, 16, 16>}, {transform_indices = @transform_1, window_bounds = array<i64: 1, 16, 16>}, {transform_indices = @transform_2, window_bounds = array<i64: 1, 16, 16>}, {transform_indices = @transform_3, window_bounds = array<i64: 1, 8, 128>}, {transform_indices = @transform_4, window_bounds = array<i64: 1, 8, 128>}]} {
    %c1_i32 = arith.constant 1 : i32
    %0 = arith.muli %arg0, %c1_i32 : i32
    %cst = arith.constant 0.000000e+00 : f32
    %1 = vector.broadcast %cst : f32 to vector<1x1xf32>
    %c0_i32 = arith.constant 0 : i32
    %2 = arith.index_cast %c0_i32 : i32 to index
    %c0 = arith.constant 0 : index
    %c0_0 = arith.constant 0 : index
    %3 = vector.load %arg1[%2, %c0, %c0_0] : memref<1x16x16xf32, #tpu.memory_space<vmem>>, vector<1x16x16xf32>
    %4 = vector.shape_cast %3 : vector<1x16x16xf32> to vector<16x16xf32>
    %5 = arith.index_cast %c0_i32 : i32 to index
    %c0_1 = arith.constant 0 : index
    %c0_2 = arith.constant 0 : index
    %6 = vector.load %arg2[%5, %c0_1, %c0_2] : memref<1x16x16xf32, #tpu.memory_space<vmem>>, vector<1x16x16xf32>
    %7 = vector.shape_cast %6 : vector<1x16x16xf32> to vector<16x16xf32>
    %8 = arith.index_cast %c0_i32 : i32 to index
    %c0_3 = arith.constant 0 : index
    %c0_4 = arith.constant 0 : index
    %9 = vector.load %arg3[%8, %c0_3, %c0_4] : memref<1x16x16xi8, #tpu.memory_space<vmem>>, vector<1x16x16xi8>
    %10 = vector.shape_cast %9 : vector<1x16x16xi8> to vector<16x16xi8>
    %11 = arith.sitofp %10 : vector<16x16xi8> to vector<16x16xf32>
    %cst_5 = arith.constant 0.000000e+00 : f32
    %12 = vector.broadcast %cst_5 : f32 to vector<16x16xf32>
    %13 = arith.cmpf ogt, %11, %12 : vector<16x16xf32>
    %14 = tpu.reciprocal %7 : vector<16x16xf32> -> vector<16x16xf32>
    %15 = arith.select %13, %14, %7 : vector<16x16xi1>, vector<16x16xf32>
    %16 = vector.extract_strided_slice %4 {offsets = [1, 1], sizes = [15, 15], strides = [1, 1]} : vector<16x16xf32> to vector<15x15xf32>
    %17 = vector.extract_strided_slice %4 {offsets = [1, 0], sizes = [15, 15], strides = [1, 1]} : vector<16x16xf32> to vector<15x15xf32>
    %18 = arith.subf %16, %17 : vector<15x15xf32>
    %19 = math.absf %18 : vector<15x15xf32>
    %20 = vector.extract_strided_slice %4 {offsets = [1, 1], sizes = [15, 15], strides = [1, 1]} : vector<16x16xf32> to vector<15x15xf32>
    %21 = vector.extract_strided_slice %4 {offsets = [0, 1], sizes = [15, 15], strides = [1, 1]} : vector<16x16xf32> to vector<15x15xf32>
    %22 = arith.subf %20, %21 : vector<15x15xf32>
    %23 = math.absf %22 : vector<15x15xf32>
    %24 = arith.addf %19, %23 : vector<15x15xf32>
    %25 = vector.extract_strided_slice %15 {offsets = [1, 1], sizes = [15, 15], strides = [1, 1]} : vector<16x16xf32> to vector<15x15xf32>
    %26 = vector.extract_strided_slice %15 {offsets = [1, 0], sizes = [15, 15], strides = [1, 1]} : vector<16x16xf32> to vector<15x15xf32>
    %27 = arith.subf %25, %26 : vector<15x15xf32>
    %28 = math.absf %27 : vector<15x15xf32>
    %29 = vector.extract_strided_slice %15 {offsets = [1, 1], sizes = [15, 15], strides = [1, 1]} : vector<16x16xf32> to vector<15x15xf32>
    %30 = vector.extract_strided_slice %15 {offsets = [0, 1], sizes = [15, 15], strides = [1, 1]} : vector<16x16xf32> to vector<15x15xf32>
    %31 = arith.subf %29, %30 : vector<15x15xf32>
    %32 = math.absf %31 : vector<15x15xf32>
    %33 = arith.addf %28, %32 : vector<15x15xf32>
    %34 = arith.subf %24, %33 : vector<15x15xf32>
    %35 = math.absf %34 : vector<15x15xf32>
    %36 = vector.extract_strided_slice %11 {offsets = [1, 1], sizes = [15, 15], strides = [1, 1]} : vector<16x16xf32> to vector<15x15xf32>
    %37 = vector.extract_strided_slice %11 {offsets = [1, 0], sizes = [15, 15], strides = [1, 1]} : vector<16x16xf32> to vector<15x15xf32>
    %38 = arith.mulf %36, %37 : vector<15x15xf32>
    %39 = vector.extract_strided_slice %11 {offsets = [0, 1], sizes = [15, 15], strides = [1, 1]} : vector<16x16xf32> to vector<15x15xf32>
    %40 = arith.mulf %38, %39 : vector<15x15xf32>
    %41 = arith.mulf %35, %40 : vector<15x15xf32>
    %42 = vector.shape_cast %41 : vector<15x15xf32> to vector<1x15x15xf32>
    %cst_6 = arith.constant dense<0.000000e+00> : vector<1xf32>
    %43 = vector.multi_reduction <add>, %42, %cst_6 [1, 2] : vector<1x15x15xf32> to vector<1xf32>
    %44 = vector.shape_cast %43 : vector<1xf32> to vector<1x1x1xf32>
    %45 = vector.extract %44[0, 0, 0] : f32 from vector<1x1x1xf32>
    %46 = vector.broadcast %45 : f32 to vector<1x1xf32>
    %47 = vector.shape_cast %40 : vector<15x15xf32> to vector<1x15x15xf32>
    %cst_7 = arith.constant dense<0.000000e+00> : vector<1xf32>
    %48 = vector.multi_reduction <add>, %47, %cst_7 [1, 2] : vector<1x15x15xf32> to vector<1xf32>
    %49 = vector.shape_cast %48 : vector<1xf32> to vector<1x1x1xf32>
    %50 = vector.extract %49[0, 0, 0] : f32 from vector<1x1x1xf32>
    %51 = vector.broadcast %50 : f32 to vector<1x1xf32>
    %52 = arith.addi %0, %c0_i32 : i32
    %c8_i32 = arith.constant 8 : i32
    %53 = arith.cmpi slt, %52, %c8_i32 : i32
    %cst_8 = arith.constant 0.000000e+00 : f32
    %54 = vector.broadcast %cst_8 : f32 to vector<1x1xf32>
    %55 = arith.select %53, %46, %54 : vector<1x1xf32>
    %cst_9 = arith.constant 0.000000e+00 : f32
    %56 = vector.broadcast %cst_9 : f32 to vector<1x1xf32>
    %57 = arith.select %53, %51, %56 : vector<1x1xf32>
    %58 = arith.addf %1, %55 : vector<1x1xf32>
    %59 = arith.addf %1, %57 : vector<1x1xf32>
    %c1_i32_10 = arith.constant 1 : i32
    %60 = vector.shape_cast %58 : vector<1x1xf32> to vector<1x1x1xf32>
    %61 = vector.broadcast %60 : vector<1x1x1xf32> to vector<1x8x128xf32>
    %c0_11 = arith.constant 0 : index
    %c0_12 = arith.constant 0 : index
    %c0_13 = arith.constant 0 : index
    %62 = vector.load %arg4[%c0_11, %c0_12, %c0_13] : memref<1x8x128xf32, #tpu.memory_space<vmem>>, vector<1x8x128xf32>
    tpu.vector_store %arg4[%c0_11, %c0_12, %c0_13], %61 {strides = array<i32>} : memref<1x8x128xf32, #tpu.memory_space<vmem>>, vector<1x8x128xf32>,
    %63 = vector.shape_cast %59 : vector<1x1xf32> to vector<1x1x1xf32>
    %64 = vector.broadcast %63 : vector<1x1x1xf32> to vector<1x8x128xf32>
    %c0_14 = arith.constant 0 : index
    %c0_15 = arith.constant 0 : index
    %c0_16 = arith.constant 0 : index
    %65 = vector.load %arg5[%c0_14, %c0_15, %c0_16] : memref<1x8x128xf32, #tpu.memory_space<vmem>>, vector<1x8x128xf32>
    tpu.vector_store %arg5[%c0_14, %c0_15, %c0_16], %64 {strides = array<i32>} : memref<1x8x128xf32, #tpu.memory_space<vmem>>, vector<1x8x128xf32>,
    return
  }
  func.func @transform_0(%arg0: i32) -> (i32, i32, i32) {
    %c0_i32 = arith.constant 0 : i32
    %c0_i32_0 = arith.constant 0 : i32
    %c0_i32_1 = arith.constant 0 : i32
    return %arg0, %c0_i32, %c0_i32_0 : i32, i32, i32
  }
  func.func @transform_1(%arg0: i32) -> (i32, i32, i32) {
    %c0_i32 = arith.constant 0 : i32
    %c0_i32_0 = arith.constant 0 : i32
    %c0_i32_1 = arith.constant 0 : i32
    return %arg0, %c0_i32, %c0_i32_0 : i32, i32, i32
  }
  func.func @transform_2(%arg0: i32) -> (i32, i32, i32) {
    %c0_i32 = arith.constant 0 : i32
    %c0_i32_0 = arith.constant 0 : i32
    %c0_i32_1 = arith.constant 0 : i32
    return %arg0, %c0_i32, %c0_i32_0 : i32, i32, i32
  }
  func.func @transform_3(%arg0: i32) -> (i32, i32, i32) {
    %c0_i32 = arith.constant 0 : i32
    %c0_i32_0 = arith.constant 0 : i32
    %c0_i32_1 = arith.constant 0 : i32
    return %arg0, %c0_i32, %c0_i32_0 : i32, i32, i32
  }
  func.func @transform_4(%arg0: i32) -> (i32, i32, i32) {
    %c0_i32 = arith.constant 0 : i32
    %c0_i32_0 = arith.constant 0 : i32
    %c0_i32_1 = arith.constant 0 : i32
    return %arg0, %c0_i32, %c0_i32_0 : i32, i32, i32
  }
}

</mosaic_0001>

<llo_original>
// kernel: tpu_custom_call.1
$region0: #{tpu_custom_call.1}
  #allocation0 [shape = 'u32[]', space=smem, size = 0x4, offset = 0x4, fixed_abs, tag = 'smem constant byte address 0x4 - core index']
  #allocation1 [shape = 'u32[72,128]{1,0:T(1,128)}', space=vmem, size = 0x9000, scoped, tag = 'internal scratch']
  %s0 = inlined_call_operand.hbm [shape: f32[8,16,16], index: 0, kind: input, shape index: {}]
  %s1 = inlined_call_operand.hbm [shape: f32[8,16,16], index: 1, kind: input, shape index: {}]
  %s2 = inlined_call_operand.hbm [shape: s8[8,16,16], index: 2, kind: input, shape index: {}]
  %s3 = inlined_call_operand.hbm [shape: f32[8,8,128], index: 3, kind: output, shape index: {0}]
  %s4 = inlined_call_operand.hbm [shape: f32[8,8,128], index: 4, kind: output, shape index: {1}]
  %5 = xla_tuple %s3, %s4
  %s6 = sld [smem:[#allocation0]]
  $region65: #{tpu_custom_call.1} parent=0
    _
  %s8 = ssub.s32 1, %s6
  %s9 = scalar_select 0, %s8, %s6
  $region1: #{tpu_custom_call.1} parent=0
    #allocation2 [shape = 'u8[16384]{0}', space=vmem, size = 0x4000, scoped, tag = 'input window, operand 0']
    #allocation3 [shape = 's32[2]{0}', space=sflag, size = 0x8, scoped, tag = 'scoped memory for tpu_custom_call.1']
    #allocation4 [shape = 's32[2]{0}', space=sflag, size = 0x8, scoped, tag = 'scoped memory for tpu_custom_call.1']
    #allocation5 [shape = 'u8[16384]{0}', space=vmem, size = 0x4000, scoped, tag = 'input window, operand 1']
    #allocation6 [shape = 's32[2]{0}', space=sflag, size = 0x8, scoped, tag = 'scoped memory for tpu_custom_call.1']
    #allocation7 [shape = 'u8[4096]{0}', space=vmem, size = 0x1000, scoped, tag = 'input window, operand 2']
    #allocation8 [shape = 'u8[8192]{0}', space=vmem, size = 0x2000, scoped, tag = 'output window, operand 0']
    #allocation9 [shape = 'u8[8192]{0}', space=vmem, size = 0x2000, scoped, tag = 'output window, operand 1']
    #allocation10 [shape = 's32[2]{0}', space=sflag, size = 0x8, scoped, tag = 'scoped memory for tpu_custom_call.1']
    %10 = vsyncpa [#allocation3], 0
    %s11 = scalar_lea.sflag [#allocation3], 1
    %12 = vsyncpa %s11, 0
    %13 = vsyncpa [#allocation6], 0
    %s14 = scalar_lea.sflag [#allocation6], 1
    %15 = vsyncpa %s14, 0
    %16 = vsyncpa [#allocation4], 0
    %s17 = scalar_lea.sflag [#allocation4], 1
    %18 = vsyncpa %s17, 0
    %19 = vsyncpa [#allocation10], 0
    %s20 = scalar_lea.sflag [#allocation10], 1
    %21 = vsyncpa %s20, 0
    loop: start=0, step=1, limit=10
    $region2: #{tpu_custom_call.1} parent=1 // loop_pre_header
      _
    $region3: #{tpu_custom_call.1} parent=1 // loop_header
      %s23 = sphi 0, %s27
      %p24 = scmp.ge.s32.totalorder %s23, 10
      %s33 = sphi 0, %s35
      %s36 = sphi 0, %s33
      %s37 = sphi 0, %s36
      %s53 = sphi 0, %s37
      %s59 = sphi 0, %s61
      %s62 = sphi 0, %s59
      %s63 = sphi 0, %s62
      %s79 = sphi 0, %s63
      %s85 = sphi 0, %s87
      %s88 = sphi 0, %s85
      %s89 = sphi 0, %s88
      %s105 = sphi 0, %s89
      %s111 = sphi 0, %s113
      %s114 = sphi 0, %s111
      %s115 = sphi 0, %s114
      %s131 = sphi 0, %s115
      %s137 = sphi 0, %s139
      %s140 = sphi 0, %s137
      %s141 = sphi 0, %s140
      %s157 = sphi 0, %s141
    $region4: #{tpu_custom_call.1} parent=1 // loop_header_branch
      %26 = sbr.rel (%p24) target = $region8
    $region5: #{tpu_custom_call.1} parent=1 // loop_body
      %s28 = ssub.s32 %s23, 1
      %s29 = ssub.s32 %s23, 2
      %s30 = sadd.s32 %s23, 1
      %s31 = ssub.s32 %s23, %s30
      %p32 = scmp.eq.s32.totalorder %s31, 0
      %s34 = sadd.s32 %s33, 1
      %s35 = scalar_select %p32, %s33, %s34
      %p38 = pneg %p32
      %p39 = scmp.eq.s32.totalorder %s23, 7
      %p40 = por %p38, %p39
      %p41 = scmp.ne.s32.totalorder %s33, %s36
      %p42 = scmp.eq.s32.totalorder %s23, 0
      %p43 = por %p41, %p42
      %p44 = scmp.ne.s32.totalorder %s33, %s36
      %p45 = scmp.eq.s32.totalorder %s28, 7
      %p46 = por %p44, %p45
      %p47 = scmp.ne.s32.totalorder %s36, %s37
      %p48 = scmp.eq.s32.totalorder %s28, 0
      %p49 = por %p47, %p48
      %p50 = scmp.ne.s32.totalorder %s36, %s37
      %p51 = scmp.eq.s32.totalorder %s29, 7
      %p52 = por %p50, %p51
      %p54 = scmp.ne.s32.totalorder %s37, %s53
      %p55 = scmp.eq.s32.totalorder %s29, 0
      %p56 = por %p54, %p55
      %s57 = ssub.s32 %s23, %s30
      %p58 = scmp.eq.s32.totalorder %s57, 0
      %s60 = sadd.s32 %s59, 1
      %s61 = scalar_select %p58, %s59, %s60
      %p64 = pneg %p58
      %p65 = scmp.eq.s32.totalorder %s23, 7
      %p66 = por %p64, %p65
      %p67 = scmp.ne.s32.totalorder %s59, %s62
      %p68 = scmp.eq.s32.totalorder %s23, 0
      %p69 = por %p67, %p68
      %p70 = scmp.ne.s32.totalorder %s59, %s62
      %p71 = scmp.eq.s32.totalorder %s28, 7
      %p72 = por %p70, %p71
      %p73 = scmp.ne.s32.totalorder %s62, %s63
      %p74 = scmp.eq.s32.totalorder %s28, 0
      %p75 = por %p73, %p74
      %p76 = scmp.ne.s32.totalorder %s62, %s63
      %p77 = scmp.eq.s32.totalorder %s29, 7
      %p78 = por %p76, %p77
      %p80 = scmp.ne.s32.totalorder %s63, %s79
      %p81 = scmp.eq.s32.totalorder %s29, 0
      %p82 = por %p80, %p81
      %s83 = ssub.s32 %s23, %s30
      %p84 = scmp.eq.s32.totalorder %s83, 0
      %s86 = sadd.s32 %s85, 1
      %s87 = scalar_select %p84, %s85, %s86
      %p90 = pneg %p84
      %p91 = scmp.eq.s32.totalorder %s23, 7
      %p92 = por %p90, %p91
      %p93 = scmp.ne.s32.totalorder %s85, %s88
      %p94 = scmp.eq.s32.totalorder %s23, 0
      %p95 = por %p93, %p94
      %p96 = scmp.ne.s32.totalorder %s85, %s88
      %p97 = scmp.eq.s32.totalorder %s28, 7
      %p98 = por %p96, %p97
      %p99 = scmp.ne.s32.totalorder %s88, %s89
      %p100 = scmp.eq.s32.totalorder %s28, 0
      %p101 = por %p99, %p100
      %p102 = scmp.ne.s32.totalorder %s88, %s89
      %p103 = scmp.eq.s32.totalorder %s29, 7
      %p104 = por %p102, %p103
      %p106 = scmp.ne.s32.totalorder %s89, %s105
      %p107 = scmp.eq.s32.totalorder %s29, 0
      %p108 = por %p106, %p107
      %s109 = ssub.s32 %s23, %s30
      %p110 = scmp.eq.s32.totalorder %s109, 0
      %s112 = sadd.s32 %s111, 1
      %s113 = scalar_select %p110, %s111, %s112
      %p116 = pneg %p110
      %p117 = scmp.eq.s32.totalorder %s23, 7
      %p118 = por %p116, %p117
      %p119 = scmp.ne.s32.totalorder %s111, %s114
      %p120 = scmp.eq.s32.totalorder %s23, 0
      %p121 = por %p119, %p120
      %p122 = scmp.ne.s32.totalorder %s111, %s114
      %p123 = scmp.eq.s32.totalorder %s28, 7
      %p124 = por %p122, %p123
      %p125 = scmp.ne.s32.totalorder %s114, %s115
      %p126 = scmp.eq.s32.totalorder %s28, 0
      %p127 = por %p125, %p126
      %p128 = scmp.ne.s32.totalorder %s114, %s115
      %p129 = scmp.eq.s32.totalorder %s29, 7
      %p130 = por %p128, %p129
      %p132 = scmp.ne.s32.totalorder %s115, %s131
      %p133 = scmp.eq.s32.totalorder %s29, 0
      %p134 = por %p132, %p133
      %s135 = ssub.s32 %s23, %s30
      %p136 = scmp.eq.s32.totalorder %s135, 0
      %s138 = sadd.s32 %s137, 1
      %s139 = scalar_select %p136, %s137, %s138
      %p142 = pneg %p136
      %p143 = scmp.eq.s32.totalorder %s23, 7
      %p144 = por %p142, %p143
      %p145 = scmp.ne.s32.totalorder %s137, %s140
      %p146 = scmp.eq.s32.totalorder %s23, 0
      %p147 = por %p145, %p146
      %p148 = scmp.ne.s32.totalorder %s137, %s140
      %p149 = scmp.eq.s32.totalorder %s28, 7
      %p150 = por %p148, %p149
      %p151 = scmp.ne.s32.totalorder %s140, %s141
      %p152 = scmp.eq.s32.totalorder %s28, 0
      %p153 = por %p151, %p152
      %p154 = scmp.ne.s32.totalorder %s140, %s141
      %p155 = scmp.eq.s32.totalorder %s29, 7
      %p156 = por %p154, %p155
      %p158 = scmp.ne.s32.totalorder %s141, %s157
      %p159 = scmp.eq.s32.totalorder %s29, 0
      %p160 = por %p158, %p159
      %p161 = scmp.le.s32.totalorder 1, %s23
      %p162 = scmp.lt.s32.totalorder %s23, 9
      %p163 = pnand %p161, %p162
      %p164 = pneg %p163
      // Predicated region
      $region9: #{tpu_custom_call.1} parent=5 // pred_check
        _
      $region10: #{tpu_custom_call.1} parent=5 // pred_check_branch
        %166 = sbr.rel (%p163) target = $region12
      $region11: #{tpu_custom_call.1} parent=5 // pred_region
        %s167 = ssub.s32 %s23, 1
      $region12: #{tpu_custom_call.1} parent=5 // pred_fallthru
        _
      %p168 = scmp.lt.s32.totalorder %s23, 8
      // Predicated region
      $region13: #{tpu_custom_call.1} parent=5 // pred_check
        %p169 = pneg %p168
      $region14: #{tpu_custom_call.1} parent=5 // pred_check_branch
        %171 = sbr.rel (%p169) target = $region16
      $region15: #{tpu_custom_call.1} parent=5 // pred_region
        // Predicated region
        $region17: #{tpu_custom_call.1} parent=15 // pred_check
          %p172 = pneg %p43
        $region18: #{tpu_custom_call.1} parent=15 // pred_check_branch
          %174 = sbr.rel (%p172) target = $region20
        $region19: #{tpu_custom_call.1} parent=15 // pred_region
          %s175 = sand.u32 %s33, 1
          %s176 = scalar_lea.sflag [#allocation3], %s175
          %s177 = sand.u32 %s33, 1
          %s178 = smul.addr %s177, 16
          %s179 = scalar_lea.vmem [#allocation2], %s178
          %181 = vsyncadd %s176, 0
          %s182 = smul.addr %s23, 2
          %s183 = smul.addr %s182, 8
          %s184 = scalar_lea.hbm %s0, %s183
          %s185 = sshll.u32 %s184, 4
          %s186 = int_to_ptr.hbm [resolvable:$true] %s185
          %s187 = sshll.u32 %s179, 4
          %s188 = int_to_ptr.vmem [resolvable:$true] %s187
          %193 = dma.hbm_to_vmem [thread:$0]  %s186, 256, %s188, %s176, 128, 128, 8
        $region20: #{tpu_custom_call.1} parent=15 // pred_fallthru
          _
        // Predicated region
        $region21: #{tpu_custom_call.1} parent=15 // pred_check
          %p194 = pneg %p69
        $region22: #{tpu_custom_call.1} parent=15 // pred_check_branch
          %196 = sbr.rel (%p194) target = $region24
        $region23: #{tpu_custom_call.1} parent=15 // pred_region
          %s197 = sand.u32 %s23, 1
          %s198 = scalar_lea.sflag [#allocation6], %s197
          %s199 = sand.u32 %s59, 1
          %s200 = smul.addr %s199, 16
          %s201 = scalar_lea.vmem [#allocation5], %s200
          %203 = vsyncadd %s198, 0
          %s204 = smul.addr %s23, 2
          %s205 = smul.addr %s204, 8
          %s206 = scalar_lea.hbm %s1, %s205
          %s207 = sshll.u32 %s206, 4
          %s208 = int_to_ptr.hbm [resolvable:$true] %s207
          %s209 = sshll.u32 %s201, 4
          %s210 = int_to_ptr.vmem [resolvable:$true] %s209
          %215 = dma.hbm_to_vmem [thread:$0]  %s208, 256, %s210, %s198, 128, 128, 8
        $region24: #{tpu_custom_call.1} parent=15 // pred_fallthru
          _
        // Predicated region
        $region25: #{tpu_custom_call.1} parent=15 // pred_check
          %p216 = pneg %p95
        $region26: #{tpu_custom_call.1} parent=15 // pred_check_branch
          %218 = sbr.rel (%p216) target = $region28
        $region27: #{tpu_custom_call.1} parent=15 // pred_region
          %s219 = sand.u32 %s23, 1
          %s220 = scalar_lea.sflag [#allocation6], %s219
          %s221 = sand.u32 %s85, 1
          %s222 = smul.addr %s221, 4
          %s223 = scalar_lea.vmem [#allocation7], %s222
          %225 = vsyncadd %s220, 0
          %s226 = smul.addr %s23, 2
          %s227 = smul.addr %s226, 2
          %s228 = scalar_lea.hbm %s2, %s227
          %s229 = sshll.u32 %s228, 4
          %s230 = int_to_ptr.hbm [resolvable:$true] %s229
          %s231 = sshll.u32 %s223, 4
          %s232 = int_to_ptr.vmem [resolvable:$true] %s231
          %237 = dma.hbm_to_vmem [thread:$0]  %s230, 64, %s232, %s220, 32, 32, 2
        $region28: #{tpu_custom_call.1} parent=15 // pred_fallthru
          _
      $region16: #{tpu_custom_call.1} parent=5 // pred_fallthru
        _
      %p238 = scmp.le.s32.totalorder 1, %s23
      %p239 = scmp.lt.s32.totalorder %s23, 9
      %p240 = pnand %p238, %p239
      %p241 = pneg %p240
      // Predicated region
      $region29: #{tpu_custom_call.1} parent=5 // pred_check
        _
      $region30: #{tpu_custom_call.1} parent=5 // pred_check_branch
        %243 = sbr.rel (%p240) target = $region32
      $region31: #{tpu_custom_call.1} parent=5 // pred_region
        %s244 = ssub.s32 %s23, 1
        %s245 = sand.u32 %s36, 1
        %s246 = scalar_lea.sflag [#allocation3], %s245
        %s247 = sand.u32 %s36, 1
        %s248 = smul.addr %s247, 16
        %s249 = scalar_lea.vmem [#allocation2], %s248
        // Predicated region
        $region33: #{tpu_custom_call.1} parent=31 // pred_check
          %p250 = pneg %p49
        $region34: #{tpu_custom_call.1} parent=31 // pred_check_branch
          %252 = sbr.rel (%p250) target = $region36
        $region35: #{tpu_custom_call.1} parent=31 // pred_region
          %254 = dma.done %s246, 256
        $region36: #{tpu_custom_call.1} parent=31 // pred_fallthru
          _
        %s255 = sand.u32 %s28, 1
        %s256 = scalar_lea.sflag [#allocation6], %s255
        %s257 = sand.u32 %s62, 1
        %s258 = smul.addr %s257, 16
        %s259 = scalar_lea.vmem [#allocation5], %s258
        // Predicated region
        $region37: #{tpu_custom_call.1} parent=31 // pred_check
          %p260 = pneg %p75
        $region38: #{tpu_custom_call.1} parent=31 // pred_check_branch
          %262 = sbr.rel (%p260) target = $region40
        $region39: #{tpu_custom_call.1} parent=31 // pred_region
          %264 = dma.done %s256, 256
        $region40: #{tpu_custom_call.1} parent=31 // pred_fallthru
          _
        %s265 = sand.u32 %s28, 1
        %s266 = scalar_lea.sflag [#allocation6], %s265
        %s267 = sand.u32 %s88, 1
        %s268 = smul.addr %s267, 4
        %s269 = scalar_lea.vmem [#allocation7], %s268
        // Predicated region
        $region41: #{tpu_custom_call.1} parent=31 // pred_check
          %p270 = pneg %p101
        $region42: #{tpu_custom_call.1} parent=31 // pred_check_branch
          %272 = sbr.rel (%p270) target = $region44
        $region43: #{tpu_custom_call.1} parent=31 // pred_region
          %274 = dma.done %s266, 64
        $region44: #{tpu_custom_call.1} parent=31 // pred_fallthru
          _
        %s275 = sand.u32 %s36, 1
        %s276 = scalar_lea.sflag [#allocation3], %s275
        %s277 = sand.u32 %s36, 1
        %s278 = smul.addr %s277, 16
        %s279 = scalar_lea.vmem [#allocation2], %s278
        %p280 = pneg %p49
        %p281 = pneg %p46
        %s282 = sand.u32 %s28, 1
        %s283 = scalar_lea.sflag [#allocation6], %s282
        %s284 = sand.u32 %s62, 1
        %s285 = smul.addr %s284, 16
        %s286 = scalar_lea.vmem [#allocation5], %s285
        %p287 = pneg %p75
        %p288 = pneg %p72
        %s289 = sand.u32 %s28, 1
        %s290 = scalar_lea.sflag [#allocation6], %s289
        %s291 = sand.u32 %s88, 1
        %s292 = smul.addr %s291, 4
        %s293 = scalar_lea.vmem [#allocation7], %s292
        %p294 = pneg %p101
        %p295 = pneg %p98
        %p296 = pneg %p127
        %p297 = pneg %p124
        %s298 = sand.u32 %s114, 1
        %s299 = scalar_lea.sflag [#allocation4], %s298
        %s300 = sand.u32 %s114, 1
        %s301 = smul.addr %s300, 8
        %s302 = scalar_lea.vmem [#allocation8], %s301
        %p303 = pneg %p153
        %p304 = pneg %p150
        %s305 = sand.u32 %s140, 1
        %s306 = scalar_lea.sflag [#allocation10], %s305
        %s307 = sand.u32 %s140, 1
        %s308 = smul.addr %s307, 8
        %s309 = scalar_lea.vmem [#allocation9], %s308
        %v310 = vld [vmem:[%s249] sm:$0xff]
        %v311 = vld [vmem:[%s249 + $0x8] sm:$0xff]
        %v312 = vld [vmem:[%s259] sm:$0xff]
        %v313 = vld [vmem:[%s259 + $0x8] sm:$0xff]
        %v314 = vld [vmem:[%s269] sm:$0x3]
        %v315 = vld [vmem:[%s269 + $0x2] sm:$0x3]
        %v316 = vunpack.c.0.s8 %v314
        %v317 = vunpack.c.0.s8 %v315
        %v318 = vcvt.s32.f32 %v316
        %v319 = vcvt.s32.f32 %v317
        %vm320 = vcmp.gt.f32.partialorder %v318, 0.0
        %vm321 = vcmp.gt.f32.partialorder %v319, 0.0
        %v322 = vrcp.pop %v312
        %v323 = vmul.f32 %v312, %v322
        %v324 = vsub.f32 1.0, %v323
        %v325 = vmul.f32 %v322, %v324
        %v326 = vadd.f32 %v322, %v325
        %vm327 = vweird.f32 %v312
        %vm328 = vweird.f32 %v322
        %vm329 = vmor %vm327, %vm328
        %v330 = vsel %vm329, %v322, %v326
        %v331 = vand.u32 2147483647, %v312
        %vm332 = vcmp.eq.f32.partialorder %v331, 8.507059e+37
        %v333 = vand.u32 %v312, 2147483648
        %v334 = vor.u32 1.1754944e-38, %v333
        %v335 = vsel %vm332, %v334, %v330
        %v336 = vrcp.pop %v313
        %v337 = vmul.f32 %v313, %v336
        %v338 = vsub.f32 1.0, %v337
        %v339 = vmul.f32 %v336, %v338
        %v340 = vadd.f32 %v336, %v339
        %vm341 = vweird.f32 %v313
        %vm342 = vweird.f32 %v336
        %vm343 = vmor %vm341, %vm342
        %v344 = vsel %vm343, %v336, %v340
        %v345 = vand.u32 2147483647, %v313
        %vm346 = vcmp.eq.f32.partialorder %v345, 8.507059e+37
        %v347 = vand.u32 %v313, 2147483648
        %v348 = vor.u32 1.1754944e-38, %v347
        %v349 = vsel %vm346, %v348, %v344
        %v350 = vsel %vm320, %v335, %v312
        %v351 = vsel %vm321, %v349, %v313
        %354 = vrot.lane.b32.xlu0 %v310, 1
        %v355 = vpop.permute.xlu0 %354
        %356 = vrot.lane.b32.xlu0 %v311, 1
        %v357 = vpop.permute.xlu0 %356
        %v360 = vsub.f32 %v310, %v355
        %v361 = vsub.f32 %v311, %v357
        %v362 = vand.u32 2147483647, %v360
        %v363 = vand.u32 2147483647, %v361
        %vm364 = vcmask 1040384
        %v365 = vrot.slane %v310, 7
        %v366 = vrot.slane %v311, 7
        %v367 = vsel %vm364, %v365, %v366
        %v370 = vsub.f32 %v310, %v365
        %v371 = vsub.f32 %v311, %v367
        %v372 = vand.u32 2147483647, %v370
        %v373 = vand.u32 2147483647, %v371
        %v374 = vadd.f32 %v362, %v372
        %v375 = vadd.f32 %v363, %v373
        %378 = vrot.lane.b32.xlu0 %v350, 1
        %v379 = vpop.permute.xlu0 %378
        %380 = vrot.lane.b32.xlu0 %v351, 1
        %v381 = vpop.permute.xlu0 %380
        %v384 = vsub.f32 %v350, %v379
        %v385 = vsub.f32 %v351, %v381
        %v386 = vand.u32 2147483647, %v384
        %v387 = vand.u32 2147483647, %v385
        %v388 = vrot.slane %v350, 7
        %v389 = vrot.slane %v351, 7
        %v390 = vsel %vm364, %v388, %v389
        %v393 = vsub.f32 %v350, %v388
        %v394 = vsub.f32 %v351, %v390
        %v395 = vand.u32 2147483647, %v393
        %v396 = vand.u32 2147483647, %v394
        %v397 = vadd.f32 %v386, %v395
        %v398 = vadd.f32 %v387, %v396
        %v399 = vsub.f32 %v374, %v397
        %v400 = vsub.f32 %v375, %v398
        %v401 = vand.u32 2147483647, %v399
        %v402 = vand.u32 2147483647, %v400
        %405 = vrot.lane.b32.xlu0 %v318, 1
        %v406 = vpop.permute.xlu0 %405
        %407 = vrot.lane.b32.xlu0 %v319, 1
        %v408 = vpop.permute.xlu0 %407
        %v411 = vmul.f32 %v318, %v406
        %v412 = vmul.f32 %v319, %v408
        %v413 = vrot.slane %v318, 7
        %v414 = vrot.slane %v319, 7
        %v415 = vsel %vm364, %v413, %v414
        %v418 = vmul.f32 %v411, %v413
        %v419 = vmul.f32 %v412, %v415
        %v420 = vmul.f32 %v401, %v418
        %v421 = vmul.f32 %v402, %v419
        %vm424 = vcmask 1046528
        %v425 = vrot.slane %v420, 1
        %v426 = vrot.slane %v421, 1
        %v427 = vsel %vm424, %v425, %v426
        %428 = vrot.lane.b32.xlu0 %v427, 127
        %v429 = vpop.permute.xlu0 %428
        %430 = vrot.lane.b32.xlu0 %v426, 127
        %v431 = vpop.permute.xlu0 %430
        %vm434 = vcmask 121856
        %v435 = vsel %vm434, %v429, 0.0
        %vm436 = vcmask 120832
        %v437 = vsel %vm436, %v431, 0.0
        %v438 = vadd.f32 %v435, %v437
        %439 = vadd.xlane.f32.xlu0 %v438
        %v440 = vpop.xlane.xlu0 %439
        %v441 = vrot.slane %v440, 4
        %v442 = vadd.f32 %v440, %v441
        %v443 = vrot.slane %v442, 2
        %v444 = vadd.f32 %v442, %v443
        %v445 = vrot.slane %v444, 1
        %v446 = vadd.f32 %v444, %v445
        %s447 = vtos %v446
        %v448 = vstv %s447
        %v451 = vrot.slane %v418, 1
        %v452 = vrot.slane %v419, 1
        %v453 = vsel %vm424, %v451, %v452
        %454 = vrot.lane.b32.xlu0 %v453, 127
        %v455 = vpop.permute.xlu0 %454
        %456 = vrot.lane.b32.xlu0 %v452, 127
        %v457 = vpop.permute.xlu0 %456
        %v460 = vsel %vm434, %v455, 0.0
        %v461 = vsel %vm436, %v457, 0.0
        %v462 = vadd.f32 %v460, %v461
        %463 = vadd.xlane.f32.xlu0 %v462
        %v464 = vpop.xlane.xlu0 %463
        %v465 = vrot.slane %v464, 4
        %v466 = vadd.f32 %v464, %v465
        %v467 = vrot.slane %v466, 2
        %v468 = vadd.f32 %v466, %v467
        %v469 = vrot.slane %v468, 1
        %v470 = vadd.f32 %v468, %v469
        %s471 = vtos %v470
        %v472 = vstv %s471
        %p473 = scmp.lt.s32.totalorder %s28, 8
        %s474 = scalar_select %p473, 1, 0
        %v475 = vstv %s474
        %vm476 = vcmp.eq.s32.totalorder %v475, 1
        %v477 = vsel %vm476, %v448, 0.0
        %v478 = vsel %vm476, %v472, 0.0
        %v479 = vadd.f32 %v477, 0.0
        %v480 = vadd.f32 %v478, 0.0
        %481 = vst [vmem:[%s302] sm:$0xff] %v479
        %482 = vst [vmem:[%s309] sm:$0xff] %v480
        %s483 = sand.u32 %s114, 1
        %s484 = scalar_lea.sflag [#allocation4], %s483
        %s485 = sand.u32 %s114, 1
        %s486 = smul.addr %s485, 8
        %s487 = scalar_lea.vmem [#allocation8], %s486
        %s488 = sand.u32 %s140, 1
        %s489 = scalar_lea.sflag [#allocation10], %s488
        %s490 = sand.u32 %s140, 1
        %s491 = smul.addr %s490, 8
        %s492 = scalar_lea.vmem [#allocation9], %s491
        // Predicated region
        $region45: #{tpu_custom_call.1} parent=31 // pred_check
          %p493 = pneg %p124
        $region46: #{tpu_custom_call.1} parent=31 // pred_check_branch
          %495 = sbr.rel (%p493) target = $region48
        $region47: #{tpu_custom_call.1} parent=31 // pred_region
          %497 = vsyncadd %s484, 0
          %s498 = smul.addr %s28, 8
          %s499 = scalar_lea.hbm %s3, %s498
          %s501 = sshll.u32 %s487, 4
          %s502 = int_to_ptr.vmem [resolvable:$true] %s501
          %s503 = sshll.u32 %s499, 4
          %s504 = int_to_ptr.hbm [resolvable:$true] %s503
          %506 = dma.vmem_to_hbm [thread:$0]  %s502, 128, %s504, %s484
        $region48: #{tpu_custom_call.1} parent=31 // pred_fallthru
          _
        // Predicated region
        $region49: #{tpu_custom_call.1} parent=31 // pred_check
          %p507 = pneg %p150
        $region50: #{tpu_custom_call.1} parent=31 // pred_check_branch
          %509 = sbr.rel (%p507) target = $region52
        $region51: #{tpu_custom_call.1} parent=31 // pred_region
          %511 = vsyncadd %s489, 0
          %s512 = smul.addr %s28, 8
          %s513 = scalar_lea.hbm %s4, %s512
          %s515 = sshll.u32 %s492, 4
          %s516 = int_to_ptr.vmem [resolvable:$true] %s515
          %s517 = sshll.u32 %s513, 4
          %s518 = int_to_ptr.hbm [resolvable:$true] %s517
          %520 = dma.vmem_to_hbm [thread:$0]  %s516, 128, %s518, %s489
        $region52: #{tpu_custom_call.1} parent=31 // pred_fallthru
          _
      $region32: #{tpu_custom_call.1} parent=5 // pred_fallthru
        _
      %p521 = scmp.le.s32.totalorder 2, %s23
      // Predicated region
      $region53: #{tpu_custom_call.1} parent=5 // pred_check
        %p522 = pneg %p521
      $region54: #{tpu_custom_call.1} parent=5 // pred_check_branch
        %524 = sbr.rel (%p522) target = $region56
      $region55: #{tpu_custom_call.1} parent=5 // pred_region
        %s525 = ssub.s32 %s23, 2
        // Predicated region
        $region57: #{tpu_custom_call.1} parent=55 // pred_check
          %p526 = pneg %p130
        $region58: #{tpu_custom_call.1} parent=55 // pred_check_branch
          %528 = sbr.rel (%p526) target = $region60
        $region59: #{tpu_custom_call.1} parent=55 // pred_region
          %s529 = sand.u32 %s115, 1
          %s530 = scalar_lea.sflag [#allocation4], %s529
          %s531 = sand.u32 %s115, 1
          %s532 = smul.addr %s531, 8
          %s533 = scalar_lea.vmem [#allocation8], %s532
          %535 = dma.done %s530, 128
        $region60: #{tpu_custom_call.1} parent=55 // pred_fallthru
          _
        // Predicated region
        $region61: #{tpu_custom_call.1} parent=55 // pred_check
          %p536 = pneg %p156
        $region62: #{tpu_custom_call.1} parent=55 // pred_check_branch
          %538 = sbr.rel (%p536) target = $region64
        $region63: #{tpu_custom_call.1} parent=55 // pred_region
          %s539 = sand.u32 %s141, 1
          %s540 = scalar_lea.sflag [#allocation10], %s539
          %s541 = sand.u32 %s141, 1
          %s542 = smul.addr %s541, 8
          %s543 = scalar_lea.vmem [#allocation9], %s542
          %545 = dma.done %s540, 128
        $region64: #{tpu_custom_call.1} parent=55 // pred_fallthru
          _
      $region56: #{tpu_custom_call.1} parent=5 // pred_fallthru
        _
    $region6: #{tpu_custom_call.1} parent=1 // loop_footer
      %s27 = sadd.s32 1, %s23
    $region7: #{tpu_custom_call.1} parent=1 // loop_footer_branch
      %22 = sbr.rel target = $region3
    $region8: #{tpu_custom_call.1} parent=1 // loop_exit
      _
    %546 = vsyncpa [#allocation3], 1
    %s547 = scalar_lea.sflag [#allocation3], 1
    %548 = vsyncpa %s547, 1
    %549 = vsyncpa [#allocation6], 1
    %s550 = scalar_lea.sflag [#allocation6], 1
    %551 = vsyncpa %s550, 1
    %552 = vsyncpa [#allocation4], 1
    %s553 = scalar_lea.sflag [#allocation4], 1
    %554 = vsyncpa %s553, 1
    %555 = vsyncpa [#allocation10], 1
    %s556 = scalar_lea.sflag [#allocation10], 1
    %557 = vsyncpa %s556, 1

</llo_original>
